<compile_context>
chip_gen: v5e
topology: v5e:2x2
jax: 0.10.0
libtpu: 0.0.40
codegen_flags: <defaults>
</compile_context>

<pallas_src>
import functools

import jax
import jax.numpy as jnp
from jax.experimental import pallas as pl
from jax.experimental.pallas import tpu as pltpu

_LANE = 128        # TPU lane width
_ROW_CHUNK = 32    # sublane rows processed per inner fori_loop step


def _refnet_kernel(x_ref, w_ref, b_ref, o_ref):
    """Fused RefNet_basic body for one (batch, spatial-rows) tile.

    x_ref : VMEM (1, C, ts1, 128)   input tile  (batch bi, all channels)
    w_ref : SMEM (C, C)             1x1x1 conv weight (out_chan, in_chan)
    b_ref : SMEM (C,)               conv bias
    o_ref : VMEM (C, 1, ts1, 128)   output tile (channel-major => transpose(1,0) for free)
    """
    C = w_ref.shape[0]
    nrows = x_ref.shape[2]

    # Hoist all weight / bias scalars out of the loops (SMEM scalar reads, once).
    w = [[w_ref[c, k] for k in range(C)] for c in range(C)]
    b = [b_ref[c] for c in range(C)]

    def process(rows):
        # Load each input channel slab once; each is a dense (rows, 128) tile.
        xin = [x_ref[0, k, rows, :].astype(jnp.float32) for k in range(C)]

        # First 1x1x1 conv: unrolled VPU MAC over input channels.
        x_conv = []
        for c in range(C):
            acc = xin[0] * w[c][0]
            for k in range(1, C):
                acc = acc + xin[k] * w[c][k]
            x_conv.append(acc + b[c])

        # t = relu(conv(relu(x_conv)))  (same weights / bias), out = x_conv + t.
        relu1 = [jnp.maximum(v, 0.0) for v in x_conv]
        for c in range(C):
            acc = relu1[0] * w[c][0]
            for k in range(1, C):
                acc = acc + relu1[k] * w[c][k]
            t = jnp.maximum(acc + b[c], 0.0)
            o_ref[c, 0, rows, :] = (x_conv[c] + t).astype(o_ref.dtype)

    n_full = nrows // _ROW_CHUNK
    rem = nrows - n_full * _ROW_CHUNK

    if n_full > 0:
        # fori_loop (not a static Python loop): bounds vreg live ranges per chunk
        # and keeps the basic block small even for 1024-row tiles.
        def body(i, carry):
            r0 = pl.multiple_of(i * _ROW_CHUNK, _ROW_CHUNK)
            process(pl.ds(r0, _ROW_CHUNK))
            return carry

        jax.lax.fori_loop(0, n_full, body, 0, unroll=2)

    if rem > 0:
        # Static tail (only when the block is the full, small spatial extent).
        process(slice(n_full * _ROW_CHUNK, nrows))


def _sublane_multiple(dtype):
    """Minimum second-minor tiling multiple for a dtype (8 f32, 16 bf16, 32 int8)."""
    return max(8, 32 // jnp.dtype(dtype).itemsize)


@functools.partial(jax.jit, static_argnames=("block_rows",))
def refnet_basic_forward(X, conv_w, conv_b, *, block_rows=1024):
    """RefNet_basic (se=False, maxpool=False) forward.

    X:      [B, C, D, H, W]  (NCDHW, like the PyTorch module)
    conv_w: [C, C]           1x1x1 Conv3d weight (out_chan, in_chan)
    conv_b: [C]              Conv3d bias
    returns [C, B, D, H, W]  == y.transpose(1, 0) of the PyTorch forward.
    """
    B, C, D, H, W = X.shape
    S = D * H * W

    # Lane-dense layout: fold the spatial axis onto (rows, 128).  NCDHW is already
    # channel-major per batch, so this is a free reshape; a zero-pad (extra HBM
    # copy) is only needed when S is not a multiple of 128.
    Sp = ((S + _LANE - 1) // _LANE) * _LANE
    x3 = X.reshape(B, C, S)
    if Sp != S:
        x3 = jnp.pad(x3, ((0, 0), (0, 0), (0, Sp - S)))
    S1 = Sp // _LANE
    x4 = x3.reshape(B, C, S1, _LANE)

    # Block rows: full extent for small volumes, otherwise a multiple of the
    # 32-row chunk (which also satisfies the 8/16/32 sublane multiple per dtype).
    chunk_mult = max(_ROW_CHUNK, _sublane_multiple(X.dtype))
    if S1 <= block_rows or S1 <= chunk_mult:
        ts1 = S1
    else:
        ts1 = max(chunk_mult, (block_rows // chunk_mult) * chunk_mult)
        if ts1 >= S1:
            ts1 = S1
    nj = pl.cdiv(S1, ts1)

    # v7x has 2 TensorCores: keep at least 2 grid steps to shard when possible.
    if B * nj < 2 and S1 >= 2 * chunk_mult:
        half = pl.cdiv(S1, 2)
        ts1 = ((half + chunk_mult - 1) // chunk_mult) * chunk_mult
        nj = pl.cdiv(S1, ts1)

    y4 = pl.pallas_call(
        _refnet_kernel,
        out_shape=jax.ShapeDtypeStruct((C, B, S1, _LANE), X.dtype),
        grid=(B, nj),
        in_specs=[
            pl.BlockSpec((1, C, ts1, _LANE), lambda bi, j: (bi, 0, j, 0)),
            pl.BlockSpec(memory_space=pltpu.MemorySpace.SMEM),   # conv weight (whole)
            pl.BlockSpec(memory_space=pltpu.MemorySpace.SMEM),   # conv bias   (whole)
        ],
        out_specs=pl.BlockSpec((C, 1, ts1, _LANE), lambda bi, j: (0, bi, j, 0)),
        compiler_params=pltpu.CompilerParams(
            dimension_semantics=("parallel", "parallel")),
    )(x4, conv_w, conv_b)

    # [C, B, S1, 128] -> [C, B, Sp] -> drop pad -> [C, B, D, H, W]  (free reshapes
    # when S % 128 == 0; a de-pad slice otherwise).
    y3 = y4.reshape(C, B, Sp)
    if Sp != S:
        y3 = y3[:, :, :S]
    return y3.reshape(C, B, D, H, W)


def _reference_forward(X, conv_w, conv_b):
    """Pure-JAX reference of the same math (for sanity checking)."""
    x_conv = jnp.einsum("bcdhw,oc->bodhw", X, conv_w) + conv_b[None, :, None, None, None]
    t = jax.nn.relu(x_conv)
    t = jnp.einsum("bcdhw,oc->bodhw", t, conv_w) + conv_b[None, :, None, None, None]
    t = jax.nn.relu(t)
    return jnp.transpose(x_conv + t, (1, 0, 2, 3, 4))


if __name__ == "__main__":
    key = jax.random.PRNGKey(0)
    k_x1, k_x2, k_x3, k_w, k_b = jax.random.split(key, 5)

    C = 4  # in_chan
    # Deterministic init mimicking PyTorch Conv3d default (uniform +/- 1/sqrt(fan_in)).
    fan_in = C * 1 * 1 * 1
    bound = 1.0 / (fan_in ** 0.5)
    conv_w = jax.random.uniform(k_w, (C, C), jnp.float32, -bound, bound)
    conv_b = jax.random.uniform(k_b, (C,), jnp.float32, -bound, bound)

    # Test 1: small volume, single block, exercises the static remainder path
    # (S = 256 -> S1 = 2 rows).
    X1 = jax.random.normal(k_x1, (2, C, 4, 8, 8), dtype=jnp.float32)
    y1 = jax.block_until_ready(refnet_basic_forward(X1, conv_w, conv_b))
    assert y1.shape == (C, 2, 4, 8, 8)
    assert jnp.allclose(y1, _reference_forward(X1, conv_w, conv_b), atol=1e-5, rtol=1e-5)

    # Test 2: medium volume (S = 16384 -> S1 = 128), default block -> full-extent
    # block with a 4-iteration fori_loop inside the kernel.
    X2 = jax.random.normal(k_x2, (2, C, 16, 32, 32), dtype=jnp.float32)
    y2 = jax.block_until_ready(refnet_basic_forward(X2, conv_w, conv_b))
    assert y2.shape == (C, 2, 16, 32, 32)
    assert jnp.allclose(y2, _reference_forward(X2, conv_w, conv_b), atol=1e-5, rtol=1e-5)

    # Test 2b: same volume with block_rows=64 -> multiple grid blocks along the
    # spatial axis (ts1 = 64, nj = 2) and 2 fori_loop chunks per block.
    y2b = jax.block_until_ready(refnet_basic_forward(X2, conv_w, conv_b, block_rows=64))
    assert y2b.shape == (C, 2, 16, 32, 32)
    assert jnp.allclose(y2b, _reference_forward(X2, conv_w, conv_b), atol=1e-5, rtol=1e-5)

    # Test 3: spatial size not a multiple of 128 (S = 105, exercises the pad /
    # de-pad fallback and the tiny full-extent block).
    X3 = jax.random.normal(k_x3, (2, C, 3, 5, 7), dtype=jnp.float32)
    y3 = jax.block_until_ready(refnet_basic_forward(X3, conv_w, conv_b))
    assert y3.shape == (C, 2, 3, 5, 7)
    assert jnp.allclose(y3, _reference_forward(X3, conv_w, conv_b), atol=1e-5, rtol=1e-5)

    print("KERNEL_OK")
</pallas_src>

<mosaic_0001>
module attributes {stable_mosaic.version = 11 : i64} {
  func.func @_refnet_kernel(%arg0: i32, %arg1: i32, %arg2: memref<1x4x2x128xf32, #tpu.memory_space<vmem>>, %arg3: memref<4x4xf32, #tpu.memory_space<smem>>, %arg4: memref<4xf32, #tpu.memory_space<smem>>, %arg5: memref<4x1x2x128xf32, #tpu.memory_space<vmem>>) attributes {dimension_semantics = [#tpu.dimension_semantics<parallel>, #tpu.dimension_semantics<parallel>], iteration_bounds = array<i64: 2, 1>, scalar_prefetch = 0 : i64, scratch_operands = 0 : i64, tpu.core_type = #tpu.core_type<tc>, window_params = [{transform_indices = @transform_0, window_bounds = array<i64: 1, 4, 2, 128>}, {transform_indices = @transform_1, window_bounds = array<i64: 4, 4>}, {transform_indices = @transform_2, window_bounds = array<i64: 4>}, {transform_indices = @transform_3, window_bounds = array<i64: 4, 1, 2, 128>}]} {
    %c0 = arith.constant 0 : index
    %c0_0 = arith.constant 0 : index
    %0 = memref.load %arg3[%c0, %c0_0] : memref<4x4xf32, #tpu.memory_space<smem>>
    %c0_1 = arith.constant 0 : index
    %c1 = arith.constant 1 : index
    %1 = memref.load %arg3[%c0_1, %c1] : memref<4x4xf32, #tpu.memory_space<smem>>
    %c0_2 = arith.constant 0 : index
    %c2 = arith.constant 2 : index
    %2 = memref.load %arg3[%c0_2, %c2] : memref<4x4xf32, #tpu.memory_space<smem>>
    %c0_3 = arith.constant 0 : index
    %c3 = arith.constant 3 : index
    %3 = memref.load %arg3[%c0_3, %c3] : memref<4x4xf32, #tpu.memory_space<smem>>
    %c1_4 = arith.constant 1 : index
    %c0_5 = arith.constant 0 : index
    %4 = memref.load %arg3[%c1_4, %c0_5] : memref<4x4xf32, #tpu.memory_space<smem>>
    %c1_6 = arith.constant 1 : index
    %c1_7 = arith.constant 1 : index
    %5 = memref.load %arg3[%c1_6, %c1_7] : memref<4x4xf32, #tpu.memory_space<smem>>
    %c1_8 = arith.constant 1 : index
    %c2_9 = arith.constant 2 : index
    %6 = memref.load %arg3[%c1_8, %c2_9] : memref<4x4xf32, #tpu.memory_space<smem>>
    %c1_10 = arith.constant 1 : index
    %c3_11 = arith.constant 3 : index
    %7 = memref.load %arg3[%c1_10, %c3_11] : memref<4x4xf32, #tpu.memory_space<smem>>
    %c2_12 = arith.constant 2 : index
    %c0_13 = arith.constant 0 : index
    %8 = memref.load %arg3[%c2_12, %c0_13] : memref<4x4xf32, #tpu.memory_space<smem>>
    %c2_14 = arith.constant 2 : index
    %c1_15 = arith.constant 1 : index
    %9 = memref.load %arg3[%c2_14, %c1_15] : memref<4x4xf32, #tpu.memory_space<smem>>
    %c2_16 = arith.constant 2 : index
    %c2_17 = arith.constant 2 : index
    %10 = memref.load %arg3[%c2_16, %c2_17] : memref<4x4xf32, #tpu.memory_space<smem>>
    %c2_18 = arith.constant 2 : index
    %c3_19 = arith.constant 3 : index
    %11 = memref.load %arg3[%c2_18, %c3_19] : memref<4x4xf32, #tpu.memory_space<smem>>
    %c3_20 = arith.constant 3 : index
    %c0_21 = arith.constant 0 : index
    %12 = memref.load %arg3[%c3_20, %c0_21] : memref<4x4xf32, #tpu.memory_space<smem>>
    %c3_22 = arith.constant 3 : index
    %c1_23 = arith.constant 1 : index
    %13 = memref.load %arg3[%c3_22, %c1_23] : memref<4x4xf32, #tpu.memory_space<smem>>
    %c3_24 = arith.constant 3 : index
    %c2_25 = arith.constant 2 : index
    %14 = memref.load %arg3[%c3_24, %c2_25] : memref<4x4xf32, #tpu.memory_space<smem>>
    %c3_26 = arith.constant 3 : index
    %c3_27 = arith.constant 3 : index
    %15 = memref.load %arg3[%c3_26, %c3_27] : memref<4x4xf32, #tpu.memory_space<smem>>
    %c0_28 = arith.constant 0 : index
    %16 = memref.load %arg4[%c0_28] : memref<4xf32, #tpu.memory_space<smem>>
    %c1_29 = arith.constant 1 : index
    %17 = memref.load %arg4[%c1_29] : memref<4xf32, #tpu.memory_space<smem>>
    %c2_30 = arith.constant 2 : index
    %18 = memref.load %arg4[%c2_30] : memref<4xf32, #tpu.memory_space<smem>>
    %c3_31 = arith.constant 3 : index
    %19 = memref.load %arg4[%c3_31] : memref<4xf32, #tpu.memory_space<smem>>
    %c0_32 = arith.constant 0 : index
    %c0_33 = arith.constant 0 : index
    %c0_34 = arith.constant 0 : index
    %c0_35 = arith.constant 0 : index
    %20 = vector.load %arg2[%c0_32, %c0_33, %c0_34, %c0_35] : memref<1x4x2x128xf32, #tpu.memory_space<vmem>>, vector<1x1x2x128xf32>
    %21 = vector.shape_cast %20 : vector<1x1x2x128xf32> to vector<2x128xf32>
    %c0_36 = arith.constant 0 : index
    %c1_37 = arith.constant 1 : index
    %c0_38 = arith.constant 0 : index
    %c0_39 = arith.constant 0 : index
    %22 = vector.load %arg2[%c0_36, %c1_37, %c0_38, %c0_39] : memref<1x4x2x128xf32, #tpu.memory_space<vmem>>, vector<1x1x2x128xf32>
    %23 = vector.shape_cast %22 : vector<1x1x2x128xf32> to vector<2x128xf32>
    %c0_40 = arith.constant 0 : index
    %c2_41 = arith.constant 2 : index
    %c0_42 = arith.constant 0 : index
    %c0_43 = arith.constant 0 : index
    %24 = vector.load %arg2[%c0_40, %c2_41, %c0_42, %c0_43] : memref<1x4x2x128xf32, #tpu.memory_space<vmem>>, vector<1x1x2x128xf32>
    %25 = vector.shape_cast %24 : vector<1x1x2x128xf32> to vector<2x128xf32>
    %c0_44 = arith.constant 0 : index
    %c3_45 = arith.constant 3 : index
    %c0_46 = arith.constant 0 : index
    %c0_47 = arith.constant 0 : index
    %26 = vector.load %arg2[%c0_44, %c3_45, %c0_46, %c0_47] : memref<1x4x2x128xf32, #tpu.memory_space<vmem>>, vector<1x1x2x128xf32>
    %27 = vector.shape_cast %26 : vector<1x1x2x128xf32> to vector<2x128xf32>
    %28 = vector.broadcast %0 : f32 to vector<2x128xf32>
    %29 = arith.mulf %21, %28 : vector<2x128xf32>
    %30 = vector.broadcast %1 : f32 to vector<2x128xf32>
    %31 = arith.mulf %23, %30 : vector<2x128xf32>
    %32 = arith.addf %29, %31 : vector<2x128xf32>
    %33 = vector.broadcast %2 : f32 to vector<2x128xf32>
    %34 = arith.mulf %25, %33 : vector<2x128xf32>
    %35 = arith.addf %32, %34 : vector<2x128xf32>
    %36 = vector.broadcast %3 : f32 to vector<2x128xf32>
    %37 = arith.mulf %27, %36 : vector<2x128xf32>
    %38 = arith.addf %35, %37 : vector<2x128xf32>
    %39 = vector.broadcast %16 : f32 to vector<2x128xf32>
    %40 = arith.addf %38, %39 : vector<2x128xf32>
    %41 = vector.broadcast %4 : f32 to vector<2x128xf32>
    %42 = arith.mulf %21, %41 : vector<2x128xf32>
    %43 = vector.broadcast %5 : f32 to vector<2x128xf32>
    %44 = arith.mulf %23, %43 : vector<2x128xf32>
    %45 = arith.addf %42, %44 : vector<2x128xf32>
    %46 = vector.broadcast %6 : f32 to vector<2x128xf32>
    %47 = arith.mulf %25, %46 : vector<2x128xf32>
    %48 = arith.addf %45, %47 : vector<2x128xf32>
    %49 = vector.broadcast %7 : f32 to vector<2x128xf32>
    %50 = arith.mulf %27, %49 : vector<2x128xf32>
    %51 = arith.addf %48, %50 : vector<2x128xf32>
    %52 = vector.broadcast %17 : f32 to vector<2x128xf32>
    %53 = arith.addf %51, %52 : vector<2x128xf32>
    %54 = vector.broadcast %8 : f32 to vector<2x128xf32>
    %55 = arith.mulf %21, %54 : vector<2x128xf32>
    %56 = vector.broadcast %9 : f32 to vector<2x128xf32>
    %57 = arith.mulf %23, %56 : vector<2x128xf32>
    %58 = arith.addf %55, %57 : vector<2x128xf32>
    %59 = vector.broadcast %10 : f32 to vector<2x128xf32>
    %60 = arith.mulf %25, %59 : vector<2x128xf32>
    %61 = arith.addf %58, %60 : vector<2x128xf32>
    %62 = vector.broadcast %11 : f32 to vector<2x128xf32>
    %63 = arith.mulf %27, %62 : vector<2x128xf32>
    %64 = arith.addf %61, %63 : vector<2x128xf32>
    %65 = vector.broadcast %18 : f32 to vector<2x128xf32>
    %66 = arith.addf %64, %65 : vector<2x128xf32>
    %67 = vector.broadcast %12 : f32 to vector<2x128xf32>
    %68 = arith.mulf %21, %67 : vector<2x128xf32>
    %69 = vector.broadcast %13 : f32 to vector<2x128xf32>
    %70 = arith.mulf %23, %69 : vector<2x128xf32>
    %71 = arith.addf %68, %70 : vector<2x128xf32>
    %72 = vector.broadcast %14 : f32 to vector<2x128xf32>
    %73 = arith.mulf %25, %72 : vector<2x128xf32>
    %74 = arith.addf %71, %73 : vector<2x128xf32>
    %75 = vector.broadcast %15 : f32 to vector<2x128xf32>
    %76 = arith.mulf %27, %75 : vector<2x128xf32>
    %77 = arith.addf %74, %76 : vector<2x128xf32>
    %78 = vector.broadcast %19 : f32 to vector<2x128xf32>
    %79 = arith.addf %77, %78 : vector<2x128xf32>
    %cst = arith.constant 0.000000e+00 : f32
    %80 = vector.broadcast %cst : f32 to vector<2x128xf32>
    %81 = arith.maximumf %40, %80 : vector<2x128xf32>
    %cst_48 = arith.constant 0.000000e+00 : f32
    %82 = vector.broadcast %cst_48 : f32 to vector<2x128xf32>
    %83 = arith.maximumf %53, %82 : vector<2x128xf32>
    %cst_49 = arith.constant 0.000000e+00 : f32
    %84 = vector.broadcast %cst_49 : f32 to vector<2x128xf32>
    %85 = arith.maximumf %66, %84 : vector<2x128xf32>
    %cst_50 = arith.constant 0.000000e+00 : f32
    %86 = vector.broadcast %cst_50 : f32 to vector<2x128xf32>
    %87 = arith.maximumf %79, %86 : vector<2x128xf32>
    %88 = vector.broadcast %0 : f32 to vector<2x128xf32>
    %89 = arith.mulf %81, %88 : vector<2x128xf32>
    %90 = vector.broadcast %1 : f32 to vector<2x128xf32>
    %91 = arith.mulf %83, %90 : vector<2x128xf32>
    %92 = arith.addf %89, %91 : vector<2x128xf32>
    %93 = vector.broadcast %2 : f32 to vector<2x128xf32>
    %94 = arith.mulf %85, %93 : vector<2x128xf32>
    %95 = arith.addf %92, %94 : vector<2x128xf32>
    %96 = vector.broadcast %3 : f32 to vector<2x128xf32>
    %97 = arith.mulf %87, %96 : vector<2x128xf32>
    %98 = arith.addf %95, %97 : vector<2x128xf32>
    %99 = vector.broadcast %16 : f32 to vector<2x128xf32>
    %100 = arith.addf %98, %99 : vector<2x128xf32>
    %cst_51 = arith.constant 0.000000e+00 : f32
    %101 = vector.broadcast %cst_51 : f32 to vector<2x128xf32>
    %102 = arith.maximumf %100, %101 : vector<2x128xf32>
    %103 = arith.addf %40, %102 : vector<2x128xf32>
    %c0_52 = arith.constant 0 : index
    %c0_53 = arith.constant 0 : index
    %c0_54 = arith.constant 0 : index
    %c0_55 = arith.constant 0 : index
    %104 = vector.load %arg5[%c0_52, %c0_53, %c0_54, %c0_55] : memref<4x1x2x128xf32, #tpu.memory_space<vmem>>, vector<1x1x2x128xf32>
    %105 = vector.shape_cast %104 : vector<1x1x2x128xf32> to vector<2x128xf32>
    %106 = vector.shape_cast %103 : vector<2x128xf32> to vector<1x1x2x128xf32>
    tpu.vector_store %arg5[%c0_52, %c0_53, %c0_54, %c0_55], %106 {strides = array<i32>} : memref<4x1x2x128xf32, #tpu.memory_space<vmem>>, vector<1x1x2x128xf32>,
    %107 = vector.broadcast %4 : f32 to vector<2x128xf32>
    %108 = arith.mulf %81, %107 : vector<2x128xf32>
    %109 = vector.broadcast %5 : f32 to vector<2x128xf32>
    %110 = arith.mulf %83, %109 : vector<2x128xf32>
    %111 = arith.addf %108, %110 : vector<2x128xf32>
    %112 = vector.broadcast %6 : f32 to vector<2x128xf32>
    %113 = arith.mulf %85, %112 : vector<2x128xf32>
    %114 = arith.addf %111, %113 : vector<2x128xf32>
    %115 = vector.broadcast %7 : f32 to vector<2x128xf32>
    %116 = arith.mulf %87, %115 : vector<2x128xf32>
    %117 = arith.addf %114, %116 : vector<2x128xf32>
    %118 = vector.broadcast %17 : f32 to vector<2x128xf32>
    %119 = arith.addf %117, %118 : vector<2x128xf32>
    %cst_56 = arith.constant 0.000000e+00 : f32
    %120 = vector.broadcast %cst_56 : f32 to vector<2x128xf32>
    %121 = arith.maximumf %119, %120 : vector<2x128xf32>
    %122 = arith.addf %53, %121 : vector<2x128xf32>
    %c1_57 = arith.constant 1 : index
    %c0_58 = arith.constant 0 : index
    %c0_59 = arith.constant 0 : index
    %c0_60 = arith.constant 0 : index
    %123 = vector.load %arg5[%c1_57, %c0_58, %c0_59, %c0_60] : memref<4x1x2x128xf32, #tpu.memory_space<vmem>>, vector<1x1x2x128xf32>
    %124 = vector.shape_cast %123 : vector<1x1x2x128xf32> to vector<2x128xf32>
    %125 = vector.shape_cast %122 : vector<2x128xf32> to vector<1x1x2x128xf32>
    tpu.vector_store %arg5[%c1_57, %c0_58, %c0_59, %c0_60], %125 {strides = array<i32>} : memref<4x1x2x128xf32, #tpu.memory_space<vmem>>, vector<1x1x2x128xf32>,
    %126 = vector.broadcast %8 : f32 to vector<2x128xf32>
    %127 = arith.mulf %81, %126 : vector<2x128xf32>
    %128 = vector.broadcast %9 : f32 to vector<2x128xf32>
    %129 = arith.mulf %83, %128 : vector<2x128xf32>
    %130 = arith.addf %127, %129 : vector<2x128xf32>
    %131 = vector.broadcast %10 : f32 to vector<2x128xf32>
    %132 = arith.mulf %85, %131 : vector<2x128xf32>
    %133 = arith.addf %130, %132 : vector<2x128xf32>
    %134 = vector.broadcast %11 : f32 to vector<2x128xf32>
    %135 = arith.mulf %87, %134 : vector<2x128xf32>
    %136 = arith.addf %133, %135 : vector<2x128xf32>
    %137 = vector.broadcast %18 : f32 to vector<2x128xf32>
    %138 = arith.addf %136, %137 : vector<2x128xf32>
    %cst_61 = arith.constant 0.000000e+00 : f32
    %139 = vector.broadcast %cst_61 : f32 to vector<2x128xf32>
    %140 = arith.maximumf %138, %139 : vector<2x128xf32>
    %141 = arith.addf %66, %140 : vector<2x128xf32>
    %c2_62 = arith.constant 2 : index
    %c0_63 = arith.constant 0 : index
    %c0_64 = arith.constant 0 : index
    %c0_65 = arith.constant 0 : index
    %142 = vector.load %arg5[%c2_62, %c0_63, %c0_64, %c0_65] : memref<4x1x2x128xf32, #tpu.memory_space<vmem>>, vector<1x1x2x128xf32>
    %143 = vector.shape_cast %142 : vector<1x1x2x128xf32> to vector<2x128xf32>
    %144 = vector.shape_cast %141 : vector<2x128xf32> to vector<1x1x2x128xf32>
    tpu.vector_store %arg5[%c2_62, %c0_63, %c0_64, %c0_65], %144 {strides = array<i32>} : memref<4x1x2x128xf32, #tpu.memory_space<vmem>>, vector<1x1x2x128xf32>,
    %145 = vector.broadcast %12 : f32 to vector<2x128xf32>
    %146 = arith.mulf %81, %145 : vector<2x128xf32>
    %147 = vector.broadcast %13 : f32 to vector<2x128xf32>
    %148 = arith.mulf %83, %147 : vector<2x128xf32>
    %149 = arith.addf %146, %148 : vector<2x128xf32>
    %150 = vector.broadcast %14 : f32 to vector<2x128xf32>
    %151 = arith.mulf %85, %150 : vector<2x128xf32>
    %152 = arith.addf %149, %151 : vector<2x128xf32>
    %153 = vector.broadcast %15 : f32 to vector<2x128xf32>
    %154 = arith.mulf %87, %153 : vector<2x128xf32>
    %155 = arith.addf %152, %154 : vector<2x128xf32>
    %156 = vector.broadcast %19 : f32 to vector<2x128xf32>
    %157 = arith.addf %155, %156 : vector<2x128xf32>
    %cst_66 = arith.constant 0.000000e+00 : f32
    %158 = vector.broadcast %cst_66 : f32 to vector<2x128xf32>
    %159 = arith.maximumf %157, %158 : vector<2x128xf32>
    %160 = arith.addf %79, %159 : vector<2x128xf32>
    %c3_67 = arith.constant 3 : index
    %c0_68 = arith.constant 0 : index
    %c0_69 = arith.constant 0 : index
    %c0_70 = arith.constant 0 : index
    %161 = vector.load %arg5[%c3_67, %c0_68, %c0_69, %c0_70] : memref<4x1x2x128xf32, #tpu.memory_space<vmem>>, vector<1x1x2x128xf32>
    %162 = vector.shape_cast %161 : vector<1x1x2x128xf32> to vector<2x128xf32>
    %163 = vector.shape_cast %160 : vector<2x128xf32> to vector<1x1x2x128xf32>
    tpu.vector_store %arg5[%c3_67, %c0_68, %c0_69, %c0_70], %163 {strides = array<i32>} : memref<4x1x2x128xf32, #tpu.memory_space<vmem>>, vector<1x1x2x128xf32>,
    return
  }
  func.func @transform_0(%arg0: i32, %arg1: i32) -> (i32, i32, i32, i32) {
    %c0_i32 = arith.constant 0 : i32
    %c0_i32_0 = arith.constant 0 : i32
    %c0_i32_1 = arith.constant 0 : i32
    return %arg0, %c0_i32, %arg1, %c0_i32_0 : i32, i32, i32, i32
  }
  func.func @transform_1(%arg0: i32, %arg1: i32) -> (i32, i32) {
    %c0_i32 = arith.constant 0 : i32
    %c0_i32_0 = arith.constant 0 : i32
    %c0_i32_1 = arith.constant 0 : i32
    return %c0_i32, %c0_i32_0 : i32, i32
  }
  func.func @transform_2(%arg0: i32, %arg1: i32) -> i32 {
    %c0_i32 = arith.constant 0 : i32
    %c0_i32_0 = arith.constant 0 : i32
    return %c0_i32 : i32
  }
  func.func @transform_3(%arg0: i32, %arg1: i32) -> (i32, i32, i32, i32) {
    %c0_i32 = arith.constant 0 : i32
    %c0_i32_0 = arith.constant 0 : i32
    %c0_i32_1 = arith.constant 0 : i32
    return %c0_i32, %arg0, %arg1, %c0_i32_0 : i32, i32, i32, i32
  }
}

</mosaic_0001>

<llo_original>
// kernel: refnet_basic_forward.1
$region0: #{refnet_basic_forward.1}
  #allocation0 [shape = 'u32[]', space=smem, size = 0x4, offset = 0x4, fixed_abs, tag = 'smem constant byte address 0x4 - core index']
  #allocation1 [shape = 'u32[72,128]{1,0:T(1,128)}', space=vmem, size = 0x9000, scoped, tag = 'internal scratch']
  %s0 = inlined_call_operand.vmem [shape: f32[2,4,2,128], index: 0, kind: input, shape index: {}]
  %s1 = inlined_call_operand.vmem [shape: f32[4,4], index: 1, kind: input, shape index: {}]
  %s2 = inlined_call_operand.vmem [shape: f32[4], index: 2, kind: input, shape index: {}]
  %s3 = inlined_call_operand.vmem [shape: f32[4,2,2,128], index: 3, kind: output, shape index: {}]
  %s4 = sld [smem:[#allocation0]]
  $region90: #{refnet_basic_forward.1} parent=0
    _
  %s6 = ssub.s32 1, %s4
  %s7 = scalar_select 0, %s6, %s4
  $region1: #{refnet_basic_forward.1} parent=0
    #allocation2 [shape = 'u8[2048]{0}', space=smem, size = 0x800, scoped, tag = 'input window, operand 1, single buffered']
    #allocation3 [shape = 's32[2]{0}', space=sflag, size = 0x8, scoped, tag = 'scoped memory for refnet_basic_forward.1']
    #allocation4 [shape = 'u8[512]{0}', space=smem, size = 0x200, scoped, tag = 'input window, operand 2, single buffered']
    #allocation5 [shape = 's32[1]{0}', space=sflag, size = 0x4, scoped, tag = 'scoped memory for refnet_basic_forward.1']
    #allocation6 [shape = 'u8[8192]{0}', space=vmem, size = 0x2000, scoped, tag = 'output window, operand 0']
    %8 = vsyncpa [#allocation3], 0
    %9 = vsyncpa [#allocation5], 0
    loop: start=0, step=1, limit=4
    $region2: #{refnet_basic_forward.1} parent=1 // loop_pre_header
      _
    $region3: #{refnet_basic_forward.1} parent=1 // loop_header
      %s11 = sphi 0, %s15
      %p12 = scmp.ge.s32.totalorder %s11, 4
      %s18 = sphi 0, %s30
      %s19 = sphi 0, %s26
      %s20 = sphi 0, %s18
      %s21 = sphi 0, %s19
      %s22 = sphi 0, %s20
      %s23 = sphi 0, %s21
      %s35 = sphi 0, %s37
      %s38 = sphi 0, %s35
      %s39 = sphi 0, %s38
      %s55 = sphi 0, %s39
      %s59 = sphi 0, %s59
      %s61 = sphi 0, %s59
      %s62 = sphi 0, %s61
      %s76 = sphi 0, %s62
      %s80 = sphi 0, %s80
      %s82 = sphi 0, %s80
      %s83 = sphi 0, %s82
      %s97 = sphi 0, %s83
      %s105 = sphi 0, %s107
      %s108 = sphi 0, %s105
      %s109 = sphi 0, %s108
      %s125 = sphi 0, %s109
    $region4: #{refnet_basic_forward.1} parent=1 // loop_header_branch
      %14 = sbr.rel (%p12) target = $region8
    $region5: #{refnet_basic_forward.1} parent=1 // loop_body
      %s16 = ssub.s32 %s11, 1
      %s17 = ssub.s32 %s11, 2
      %s24 = sadd.s32 1, %s19
      %p25 = scmp.ge.s32.totalorder %s24, 1
      %s26 = scalar_select %p25, 0, %s24
      %s27 = sadd.s32 1, %s18
      %s28 = scalar_select %p25, %s27, %s18
      %p29 = scmp.ge.s32.totalorder %s28, 2
      %s30 = scalar_select %p29, 0, %s28
      %s31 = ssub.s32 %s18, %s30
      %s32 = ssub.s32 %s19, %s26
      %s33 = sor.u32 %s31, %s32
      %p34 = scmp.eq.s32.totalorder %s33, 0
      %s36 = sadd.s32 %s35, 1
      %s37 = scalar_select %p34, %s35, %s36
      %p40 = pneg %p34
      %p41 = scmp.eq.s32.totalorder %s11, 1
      %p42 = por %p40, %p41
      %p43 = scmp.ne.s32.totalorder %s35, %s38
      %p44 = scmp.eq.s32.totalorder %s11, 0
      %p45 = por %p43, %p44
      %p46 = scmp.ne.s32.totalorder %s35, %s38
      %p47 = scmp.eq.s32.totalorder %s16, 1
      %p48 = por %p46, %p47
      %p49 = scmp.ne.s32.totalorder %s38, %s39
      %p50 = scmp.eq.s32.totalorder %s16, 0
      %p51 = por %p49, %p50
      %p52 = scmp.ne.s32.totalorder %s38, %s39
      %p53 = scmp.eq.s32.totalorder %s17, 1
      %p54 = por %p52, %p53
      %p56 = scmp.ne.s32.totalorder %s39, %s55
      %p57 = scmp.eq.s32.totalorder %s17, 0
      %p58 = por %p56, %p57
      %s60 = sadd.s32 %s59, 1
      %p63 = scmp.eq.s32.totalorder %s11, 1
      %p64 = scmp.ne.s32.totalorder %s59, %s61
      %p65 = scmp.eq.s32.totalorder %s11, 0
      %p66 = por %p64, %p65
      %p67 = scmp.ne.s32.totalorder %s59, %s61
      %p68 = scmp.eq.s32.totalorder %s16, 1
      %p69 = por %p67, %p68
      %p70 = scmp.ne.s32.totalorder %s61, %s62
      %p71 = scmp.eq.s32.totalorder %s16, 0
      %p72 = por %p70, %p71
      %p73 = scmp.ne.s32.totalorder %s61, %s62
      %p74 = scmp.eq.s32.totalorder %s17, 1
      %p75 = por %p73, %p74
      %p77 = scmp.ne.s32.totalorder %s62, %s76
      %p78 = scmp.eq.s32.totalorder %s17, 0
      %p79 = por %p77, %p78
      %s81 = sadd.s32 %s80, 1
      %p84 = scmp.eq.s32.totalorder %s11, 1
      %p85 = scmp.ne.s32.totalorder %s80, %s82
      %p86 = scmp.eq.s32.totalorder %s11, 0
      %p87 = por %p85, %p86
      %p88 = scmp.ne.s32.totalorder %s80, %s82
      %p89 = scmp.eq.s32.totalorder %s16, 1
      %p90 = por %p88, %p89
      %p91 = scmp.ne.s32.totalorder %s82, %s83
      %p92 = scmp.eq.s32.totalorder %s16, 0
      %p93 = por %p91, %p92
      %p94 = scmp.ne.s32.totalorder %s82, %s83
      %p95 = scmp.eq.s32.totalorder %s17, 1
      %p96 = por %p94, %p95
      %p98 = scmp.ne.s32.totalorder %s83, %s97
      %p99 = scmp.eq.s32.totalorder %s17, 0
      %p100 = por %p98, %p99
      %s101 = ssub.s32 %s18, %s30
      %s102 = ssub.s32 %s19, %s26
      %s103 = sor.u32 %s101, %s102
      %p104 = scmp.eq.s32.totalorder %s103, 0
      %s106 = sadd.s32 %s105, 1
      %s107 = scalar_select %p104, %s105, %s106
      %p110 = pneg %p104
      %p111 = scmp.eq.s32.totalorder %s11, 1
      %p112 = por %p110, %p111
      %p113 = scmp.ne.s32.totalorder %s105, %s108
      %p114 = scmp.eq.s32.totalorder %s11, 0
      %p115 = por %p113, %p114
      %p116 = scmp.ne.s32.totalorder %s105, %s108
      %p117 = scmp.eq.s32.totalorder %s16, 1
      %p118 = por %p116, %p117
      %p119 = scmp.ne.s32.totalorder %s108, %s109
      %p120 = scmp.eq.s32.totalorder %s16, 0
      %p121 = por %p119, %p120
      %p122 = scmp.ne.s32.totalorder %s108, %s109
      %p123 = scmp.eq.s32.totalorder %s17, 1
      %p124 = por %p122, %p123
      %p126 = scmp.ne.s32.totalorder %s109, %s125
      %p127 = scmp.eq.s32.totalorder %s17, 0
      %p128 = por %p126, %p127
      %p129 = scmp.le.s32.totalorder 1, %s11
      %p130 = scmp.lt.s32.totalorder %s11, 3
      %p131 = pnand %p129, %p130
      %p132 = pneg %p131
      // Predicated region
      $region9: #{refnet_basic_forward.1} parent=5 // pred_check
        _
      $region10: #{refnet_basic_forward.1} parent=5 // pred_check_branch
        %134 = sbr.rel (%p131) target = $region12
      $region11: #{refnet_basic_forward.1} parent=5 // pred_region
        %s135 = ssub.s32 %s11, 1
        // Predicated region
        $region13: #{refnet_basic_forward.1} parent=11 // pred_check
          %p136 = pneg %p72
        $region14: #{refnet_basic_forward.1} parent=11 // pred_check_branch
          %138 = sbr.rel (%p136) target = $region16
        $region15: #{refnet_basic_forward.1} parent=11 // pred_region
          %140 = vsyncadd [#allocation3], 0
          %s142 = sshll.u32 %s1, 4
          %s143 = int_to_ptr.vmem [resolvable:$true] %s142
          %145 = dma.vmem_to_smem %s143, 64, [#allocation2], [#allocation3]
        $region16: #{refnet_basic_forward.1} parent=11 // pred_fallthru
          _
        // Predicated region
        $region17: #{refnet_basic_forward.1} parent=11 // pred_check
          %p146 = pneg %p93
        $region18: #{refnet_basic_forward.1} parent=11 // pred_check_branch
          %148 = sbr.rel (%p146) target = $region20
        $region19: #{refnet_basic_forward.1} parent=11 // pred_region
          %150 = vsyncadd [#allocation5], 0
          %s152 = sshll.u32 %s2, 4
          %s153 = int_to_ptr.vmem [resolvable:$true] %s152
          %155 = dma.vmem_to_smem %s153, 16, [#allocation4], [#allocation5]
        $region20: #{refnet_basic_forward.1} parent=11 // pred_fallthru
          _
      $region12: #{refnet_basic_forward.1} parent=5 // pred_fallthru
        _
      %p156 = scmp.lt.s32.totalorder %s11, 2
      // Predicated region
      $region21: #{refnet_basic_forward.1} parent=5 // pred_check
        %p157 = pneg %p156
      $region22: #{refnet_basic_forward.1} parent=5 // pred_check_branch
        %159 = sbr.rel (%p157) target = $region24
      $region23: #{refnet_basic_forward.1} parent=5 // pred_region
        // Predicated region
        $region25: #{refnet_basic_forward.1} parent=23 // pred_check
          %p160 = pneg %p45
        $region26: #{refnet_basic_forward.1} parent=23 // pred_check_branch
          %162 = sbr.rel (%p160) target = $region28
        $region27: #{refnet_basic_forward.1} parent=23 // pred_region
          %p163 = scmp.lt.s32.totalorder %s18, 1
          %s164 = scalar_select %p163, %s18, 1
          %p165 = scmp.lt.s32.totalorder %s19, 0
          %s166 = scalar_select %p165, %s19, 0
          %s167 = smul.addr %s164, 4
          %s168 = sadd.s32 %s166, %s167
          %s169 = smul.addr %s168, 2
          %s170 = scalar_lea.vmem %s0, %s169
        $region28: #{refnet_basic_forward.1} parent=23 // pred_fallthru
          _
      $region24: #{refnet_basic_forward.1} parent=5 // pred_fallthru
        _
      %p171 = scmp.le.s32.totalorder 1, %s11
      %p172 = scmp.lt.s32.totalorder %s11, 3
      %p173 = pnand %p171, %p172
      %p174 = pneg %p173
      // Predicated region
      $region29: #{refnet_basic_forward.1} parent=5 // pred_check
        _
      $region30: #{refnet_basic_forward.1} parent=5 // pred_check_branch
        %176 = sbr.rel (%p173) target = $region32
      $region31: #{refnet_basic_forward.1} parent=5 // pred_region
        %s177 = ssub.s32 %s11, 1
        // Predicated region
        $region33: #{refnet_basic_forward.1} parent=31 // pred_check
          %p178 = pneg %p72
        $region34: #{refnet_basic_forward.1} parent=31 // pred_check_branch
          %180 = sbr.rel (%p178) target = $region36
        $region35: #{refnet_basic_forward.1} parent=31 // pred_region
          %182 = dma.done [#allocation3], 64
        $region36: #{refnet_basic_forward.1} parent=31 // pred_fallthru
          _
        // Predicated region
        $region37: #{refnet_basic_forward.1} parent=31 // pred_check
          %p183 = pneg %p93
        $region38: #{refnet_basic_forward.1} parent=31 // pred_check_branch
          %185 = sbr.rel (%p183) target = $region40
        $region39: #{refnet_basic_forward.1} parent=31 // pred_region
          %187 = dma.done [#allocation5], 16
        $region40: #{refnet_basic_forward.1} parent=31 // pred_fallthru
          _
        %188 = sfence
        %p189 = scmp.lt.s32.totalorder %s20, 1
        %s190 = scalar_select %p189, %s20, 1
        %p191 = scmp.lt.s32.totalorder %s21, 0
        %s192 = scalar_select %p191, %s21, 0
        %s193 = smul.addr %s190, 4
        %s194 = sadd.s32 %s192, %s193
        %s195 = smul.addr %s194, 2
        %s196 = scalar_lea.vmem %s0, %s195
        %p197 = pneg %p51
        %p198 = pneg %p48
        %p199 = pneg %p72
        %p200 = pneg %p69
        %p201 = pneg %p93
        %p202 = pneg %p90
        %p203 = pneg %p121
        %p204 = pneg %p118
        %s205 = sand.u32 %s108, 1
        %s206 = sand.u32 %s108, 1
        %s207 = smul.addr %s206, 8
        %s208 = scalar_lea.vmem [#allocation6], %s207
        %p209 = scmp.lt.s32.totalorder %s20, 1
        %s210 = scalar_select %p209, %s20, 1
        %p211 = scmp.lt.s32.totalorder %s21, 0
        %s212 = scalar_select %p211, %s21, 0
        %s213 = smul.addr %s210, 4
        %s214 = sadd.s32 %s212, %s213
        %s215 = smul.addr %s214, 2
        %s216 = scalar_lea.vmem %s0, %s215
        %s217 = sld [smem:[#allocation2]]
        %s218 = sld [smem:[#allocation2 + $0x1]]
        %s219 = sld [smem:[#allocation2 + $0x2]]
        %s220 = sld [smem:[#allocation2 + $0x3]]
        %s221 = sld [smem:[#allocation2 + $0x80]]
        %s222 = sld [smem:[#allocation2 + $0x81]]
        %s223 = sld [smem:[#allocation2 + $0x82]]
        %s224 = sld [smem:[#allocation2 + $0x83]]
        %s225 = sld [smem:[#allocation2 + $0x100]]
        %s226 = sld [smem:[#allocation2 + $0x101]]
        %s227 = sld [smem:[#allocation2 + $0x102]]
        %s228 = sld [smem:[#allocation2 + $0x103]]
        %s229 = sld [smem:[#allocation2 + $0x180]]
        %s230 = sld [smem:[#allocation2 + $0x181]]
        %s231 = sld [smem:[#allocation2 + $0x182]]
        %s232 = sld [smem:[#allocation2 + $0x183]]
        %s233 = sld [smem:[#allocation4]]
        %s234 = sld [smem:[#allocation4 + $0x1]]
        %s235 = sld [smem:[#allocation4 + $0x2]]
        %s236 = sld [smem:[#allocation4 + $0x3]]
        %v237 = vld [vmem:[%s216] sm:$0x3]
        %s238 = scalar_lea.vmem %s216, 2
        %v239 = vld [vmem:[%s238] sm:$0x3]
        %s240 = scalar_lea.vmem %s216, 4
        %v241 = vld [vmem:[%s240] sm:$0x3]
        %s242 = scalar_lea.vmem %s216, 6
        %v243 = vld [vmem:[%s242] sm:$0x3]
        %v244 = vstv %s217
        %v245 = vmul.f32 %v237, %v244
        %v246 = vstv %s218
        %v247 = vmul.f32 %v239, %v246
        %v248 = vadd.f32 %v245, %v247
        %v249 = vstv %s219
        %v250 = vmul.f32 %v241, %v249
        %v251 = vadd.f32 %v248, %v250
        %v252 = vstv %s220
        %v253 = vmul.f32 %v243, %v252
        %v254 = vadd.f32 %v251, %v253
        %v255 = vstv %s233
        %v256 = vadd.f32 %v254, %v255
        %v257 = vstv %s221
        %v258 = vmul.f32 %v237, %v257
        %v259 = vstv %s222
        %v260 = vmul.f32 %v239, %v259
        %v261 = vadd.f32 %v258, %v260
        %v262 = vstv %s223
        %v263 = vmul.f32 %v241, %v262
        %v264 = vadd.f32 %v261, %v263
        %v265 = vstv %s224
        %v266 = vmul.f32 %v243, %v265
        %v267 = vadd.f32 %v264, %v266
        %v268 = vstv %s234
        %v269 = vadd.f32 %v267, %v268
        %v270 = vstv %s225
        %v271 = vmul.f32 %v237, %v270
        %v272 = vstv %s226
        %v273 = vmul.f32 %v239, %v272
        %v274 = vadd.f32 %v271, %v273
        %v275 = vstv %s227
        %v276 = vmul.f32 %v241, %v275
        %v277 = vadd.f32 %v274, %v276
        %v278 = vstv %s228
        %v279 = vmul.f32 %v243, %v278
        %v280 = vadd.f32 %v277, %v279
        %v281 = vstv %s235
        %v282 = vadd.f32 %v280, %v281
        %v283 = vstv %s229
        %v284 = vmul.f32 %v237, %v283
        %v285 = vstv %s230
        %v286 = vmul.f32 %v239, %v285
        %v287 = vadd.f32 %v284, %v286
        %v288 = vstv %s231
        %v289 = vmul.f32 %v241, %v288
        %v290 = vadd.f32 %v287, %v289
        %v291 = vstv %s232
        %v292 = vmul.f32 %v243, %v291
        %v293 = vadd.f32 %v290, %v292
        %v294 = vstv %s236
        %v295 = vadd.f32 %v293, %v294
        %v296 = vmax.f32 %v256, 0.0
        %v297 = vmax.f32 %v269, 0.0
        %v298 = vmax.f32 %v282, 0.0
        %v299 = vmax.f32 %v295, 0.0
        %v300 = vmul.f32 %v296, %v244
        %v301 = vmul.f32 %v297, %v246
        %v302 = vadd.f32 %v300, %v301
        %v303 = vmul.f32 %v298, %v249
        %v304 = vadd.f32 %v302, %v303
        %v305 = vmul.f32 %v299, %v252
        %v306 = vadd.f32 %v304, %v305
        %v307 = vadd.f32 %v306, %v255
        %v308 = vmax.f32 %v307, 0.0
        %v309 = vadd.f32 %v256, %v308
        %310 = vst [vmem:[%s208] sm:$0x3] %v309
        %v311 = vmul.f32 %v296, %v257
        %v312 = vmul.f32 %v297, %v259
        %v313 = vadd.f32 %v311, %v312
        %v314 = vmul.f32 %v298, %v262
        %v315 = vadd.f32 %v313, %v314
        %v316 = vmul.f32 %v299, %v265
        %v317 = vadd.f32 %v315, %v316
        %v318 = vadd.f32 %v317, %v268
        %v319 = vmax.f32 %v318, 0.0
        %v320 = vadd.f32 %v269, %v319
        %s321 = scalar_lea.vmem %s208, 2 [#allocation6]
        %322 = vst [vmem:[%s321] sm:$0x3] %v320
        %v323 = vmul.f32 %v296, %v270
        %v324 = vmul.f32 %v297, %v272
        %v325 = vadd.f32 %v323, %v324
        %v326 = vmul.f32 %v298, %v275
        %v327 = vadd.f32 %v325, %v326
        %v328 = vmul.f32 %v299, %v278
        %v329 = vadd.f32 %v327, %v328
        %v330 = vadd.f32 %v329, %v281
        %v331 = vmax.f32 %v330, 0.0
        %v332 = vadd.f32 %v282, %v331
        %s333 = scalar_lea.vmem %s208, 4 [#allocation6]
        %334 = vst [vmem:[%s333] sm:$0x3] %v332
        %v335 = vmul.f32 %v296, %v283
        %v336 = vmul.f32 %v297, %v285
        %v337 = vadd.f32 %v335, %v336
        %v338 = vmul.f32 %v298, %v288
        %v339 = vadd.f32 %v337, %v338
        %v340 = vmul.f32 %v299, %v291
        %v341 = vadd.f32 %v339, %v340
        %v342 = vadd.f32 %v341, %v294
        %v343 = vmax.f32 %v342, 0.0
        %v344 = vadd.f32 %v295, %v343
        %s345 = scalar_lea.vmem %s208, 6 [#allocation6]
        %346 = vst [vmem:[%s345] sm:$0x3] %v344
        %s347 = sand.u32 %s108, 1
        %s348 = sand.u32 %s108, 1
        %s349 = smul.addr %s348, 8
        %s350 = scalar_lea.vmem [#allocation6], %s349
        // Predicated region
        $region41: #{refnet_basic_forward.1} parent=31 // pred_check
          %p351 = pneg %p118
        $region42: #{refnet_basic_forward.1} parent=31 // pred_check_branch
          %353 = sbr.rel (%p351) target = $region44
        $region43: #{refnet_basic_forward.1} parent=31 // pred_region
          %s354 = sadd.s32 %s21, %s20
          %s355 = smul.addr %s354, 2
          %s356 = scalar_lea.vmem %s3, %s355
          // Predicated region
          $region45: #{refnet_basic_forward.1} parent=43 // pred_check
            _
          $region46: #{refnet_basic_forward.1} parent=43 // pred_check_branch
            %358 = sbr.rel (0) target = $region48
          $region47: #{refnet_basic_forward.1} parent=43 // pred_region
            // Predicated region
            $region49: #{refnet_basic_forward.1} parent=47 // pred_check
              _
            $region50: #{refnet_basic_forward.1} parent=47 // pred_check_branch
              %360 = sbr.rel target = $region52
            $region51: #{refnet_basic_forward.1} parent=47 // pred_region
              // Predicated region
              $region64: #{refnet_basic_forward.1} parent=51 // pred_check
                _
              $region65: #{refnet_basic_forward.1} parent=51 // pred_check_branch
                %382 = sbr.rel (0) target = $region67
              $region66: #{refnet_basic_forward.1} parent=51 // pred_region
                loop: start=0, step=1, limit=1
                $region68: #{refnet_basic_forward.1} parent=66 // loop_pre_header
                  _
                $region69: #{refnet_basic_forward.1} parent=66 // loop_header
                  %s384 = sphi 0, %s388
                  %p385 = scmp.ge.s32.totalorder %s384, 1
                  %s389 = sphi %s350, %s350
                  %s390 = sphi %s356, %s356
                $region70: #{refnet_basic_forward.1} parent=66 // loop_header_branch
                  %387 = sbr.rel (%p385) target = $region74
                $region71: #{refnet_basic_forward.1} parent=66 // loop_body
                  _
                $region72: #{refnet_basic_forward.1} parent=66 // loop_footer
                  %s388 = sadd.s32 1, %s384
                $region73: #{refnet_basic_forward.1} parent=66 // loop_footer_branch
                  %383 = sbr.rel target = $region69
                $region74: #{refnet_basic_forward.1} parent=66 // loop_exit
                  _
                %s392 = ssub.s32 4, 1
                loop: start=0, step=1, limit=1
                $region75: #{refnet_basic_forward.1} parent=66 // loop_pre_header
                  _
                $region76: #{refnet_basic_forward.1} parent=66 // loop_header
                  %s394 = sphi 0, %s398
                  %p395 = scmp.ge.s32.totalorder %s394, 1
                  %s399 = sphi %s350, %s350
                  %s400 = sphi %s356, %s356
                $region77: #{refnet_basic_forward.1} parent=66 // loop_header_branch
                  %397 = sbr.rel (%p395) target = $region81
                $region78: #{refnet_basic_forward.1} parent=66 // loop_body
                  %v401 = vld [vmem:[%s399] sm:%s392]
                  %402 = vst [vmem:[%s400] sm:%s392] %v401
                  %v403 = vld [vmem:[%s399 + $0x2] sm:%s392]
                  %404 = vst [vmem:[%s400 + $0x4] sm:%s392] %v403
                  %v405 = vld [vmem:[%s399 + $0x4] sm:%s392]
                  %406 = vst [vmem:[%s400 + $0x8] sm:%s392] %v405
                  %v407 = vld [vmem:[%s399 + $0x6] sm:%s392]
                  %408 = vst [vmem:[%s400 + $0xc] sm:%s392] %v407
                $region79: #{refnet_basic_forward.1} parent=66 // loop_footer
                  %s398 = sadd.s32 1, %s394
                $region80: #{refnet_basic_forward.1} parent=66 // loop_footer_branch
                  %393 = sbr.rel target = $region76
                $region81: #{refnet_basic_forward.1} parent=66 // loop_exit
                  _
              $region67: #{refnet_basic_forward.1} parent=51 // pred_fallthru
                _
            $region52: #{refnet_basic_forward.1} parent=47 // pred_fallthru
              _
            // Predicated region
            $region53: #{refnet_basic_forward.1} parent=47 // pred_check
              _
            $region54: #{refnet_basic_forward.1} parent=47 // pred_check_branch
              %362 = sbr.rel (0) target = $region56
            $region55: #{refnet_basic_forward.1} parent=47 // pred_region
              %s364 = ssub.s32 4, 1
              loop: start=0, step=1, limit=1
              $region57: #{refnet_basic_forward.1} parent=55 // loop_pre_header
                _
              $region58: #{refnet_basic_forward.1} parent=55 // loop_header
                %s366 = sphi 0, %s370
                %p367 = scmp.ge.s32.totalorder %s366, 1
                %s371 = sphi %s350, %s350
                %s372 = sphi %s356, %s356
              $region59: #{refnet_basic_forward.1} parent=55 // loop_header_branch
                %369 = sbr.rel (%p367) target = $region63
              $region60: #{refnet_basic_forward.1} parent=55 // loop_body
                %v373 = vld [vmem:[%s371] sm:%s364]
                %374 = vst [vmem:[%s372] sm:%s364] %v373
                %v375 = vld [vmem:[%s371 + $0x2] sm:%s364]
                %376 = vst [vmem:[%s372 + $0x4] sm:%s364] %v375
                %v377 = vld [vmem:[%s371 + $0x4] sm:%s364]
                %378 = vst [vmem:[%s372 + $0x8] sm:%s364] %v377
                %v379 = vld [vmem:[%s371 + $0x6] sm:%s364]
                %380 = vst [vmem:[%s372 + $0xc] sm:%s364] %v379
              $region61: #{refnet_basic_forward.1} parent=55 // loop_footer
                %s370 = sadd.s32 1, %s366
              $region62: #{refnet_basic_forward.1} parent=55 // loop_footer_branch
                %365 = sbr.rel target = $region58
              $region63: #{refnet_basic_forward.1} parent=55 // loop_exit
                _
            $region56: #{refnet_basic_forward.1} parent=47 // pred_fallthru
              _
          $region48: #{refnet_basic_forward.1} parent=43 // pred_fallthru
            _
          %409 = vnop
        $region44: #{refnet_basic_forward.1} parent=31 // pred_fallthru
          _
      $region32: #{refnet_basic_forward.1} parent=5 // pred_fallthru
        _
      %p410 = scmp.le.s32.totalorder 2, %s11
      // Predicated region
      $region82: #{refnet_basic_forward.1} parent=5 // pred_check
        %p411 = pneg %p410
      $region83: #{refnet_basic_forward.1} parent=5 // pred_check_branch
        %413 = sbr.rel (%p411) target = $region85
      $region84: #{refnet_basic_forward.1} parent=5 // pred_region
        %s414 = ssub.s32 %s11, 2
        // Predicated region
        $region86: #{refnet_basic_forward.1} parent=84 // pred_check
          %p415 = pneg %p124
        $region87: #{refnet_basic_forward.1} parent=84 // pred_check_branch
          %417 = sbr.rel (%p415) target = $region89
        $region88: #{refnet_basic_forward.1} parent=84 // pred_region
          %s418 = sand.u32 %s109, 1
          %s419 = sand.u32 %s109, 1
          %s420 = smul.addr %s419, 8
          %s421 = scalar_lea.vmem [#allocation6], %s420
        $region89: #{refnet_basic_forward.1} parent=84 // pred_fallthru
          _
      $region85: #{refnet_basic_forward.1} parent=5 // pred_fallthru
        _
    $region6: #{refnet_basic_forward.1} parent=1 // loop_footer
      %s15 = sadd.s32 1, %s11
    $region7: #{refnet_basic_forward.1} parent=1 // loop_footer_branch
      %10 = sbr.rel target = $region3
    $region8: #{refnet_basic_forward.1} parent=1 // loop_exit
      _
    %422 = vsyncpa [#allocation3], 1
    %s423 = scalar_lea.sflag [#allocation3], 1
    %424 = vsyncpa %s423, 1
    %425 = vsyncpa [#allocation5], 1

</llo_original>
